<compile_context>
chip_gen: v6e
topology: v6e:2x2x1
jax: 0.10.0
libtpu: 0.0.40
codegen_flags: <defaults>
</compile_context>

<pallas_src>
import functools

import jax
import jax.numpy as jnp
import numpy as np
from jax.experimental import pallas as pl
from jax.experimental.pallas import tpu as pltpu


_FUSED_MAX_NODES = 1024  # padded bf16 A_hat <= 2 MiB -> whole forward fits in VMEM


def _round_up(x, m):
    return ((x + m - 1) // m) * m


def _build_normalized_adjacency(edge_indices, num_nodes, padded_nodes):
    """Dense A_hat = D^-1/2 (A + I) D^-1/2, built directly at the padded shape."""
    src = edge_indices[0].astype(jnp.int32)
    dst = edge_indices[1].astype(jnp.int32)
    adj = jnp.zeros((padded_nodes, padded_nodes), jnp.float32)
    adj = adj.at[dst, src].add(1.0)                       # messages src -> dst
    diag = jnp.arange(num_nodes, dtype=jnp.int32)
    adj = adj.at[diag, diag].add(1.0)                     # self loops (real nodes only)
    deg = jnp.sum(adj, axis=1)
    d_inv_sqrt = jnp.where(deg > 0.0, jax.lax.rsqrt(jnp.maximum(deg, 1e-12)), 0.0)
    return d_inv_sqrt[:, None] * adj * d_inv_sqrt[None, :]   # padded rows/cols stay 0


# ---------------------------------------------------------------------------
# Small-graph path: the entire 2-layer forward in ONE pallas_call (VMEM-resident)
# ---------------------------------------------------------------------------
def _fused_gcn_kernel(a_ref, x1_ref, w1_ref, b1_ref, le_ref, w2a_ref, w2b_ref,
                      b2_ref, out_ref):
    a = a_ref[...]                                                # (Np, Np) bf16
    # layer 1: relu(A_hat @ (X1 @ W1) + b1)
    xw1 = jnp.dot(x1_ref[...], w1_ref[...],
                  preferred_element_type=jnp.float32)             # f32 accumulate
    h = jnp.dot(a, xw1.astype(jnp.bfloat16),
                preferred_element_type=jnp.float32) + b1_ref[...]
    h = jnp.maximum(h, 0.0)
    # TODO(synk): training-mode dropout (pltpu.prng_seed + pltpu.stateful_bernoulli);
    # eval mode (training=False) is the identity, as implemented here.
    # layer 2: A_hat @ (concat(h, le) @ W2) + b2 == A_hat @ (h @ W2a + le @ W2b) + b2
    xw2 = (jnp.dot(h.astype(jnp.bfloat16), w2a_ref[...],
                   preferred_element_type=jnp.float32)
           + jnp.dot(le_ref[...], w2b_ref[...],
                     preferred_element_type=jnp.float32))
    out = jnp.dot(a, xw2.astype(jnp.bfloat16),
                  preferred_element_type=jnp.float32) + b2_ref[...]
    out_ref[...] = out.astype(out_ref.dtype)


@jax.jit
def _forward_fused(edge_indices, features, location_embedding, w1, b1, w2, b2):
    n, in_c = features.shape
    loc_d = location_embedding.shape[1]
    f1 = w1.shape[1]
    out_c = w2.shape[1]

    np_ = _round_up(n, 128)
    f1p = _round_up(in_c + loc_d, 128)
    h1p = _round_up(f1, 128)
    lp = _round_up(loc_d, 128)
    op = _round_up(out_c, 128)

    # bf16 MXU operands (f32 accumulation in-kernel); A_hat built padded, once.
    a_hat = _build_normalized_adjacency(edge_indices, n, np_).astype(jnp.bfloat16)
    x1 = jnp.pad(
        jnp.concatenate([features, location_embedding], axis=-1).astype(jnp.bfloat16),
        ((0, np_ - n), (0, f1p - (in_c + loc_d))))
    le = jnp.pad(location_embedding.astype(jnp.bfloat16),
                 ((0, np_ - n), (0, lp - loc_d)))
    w1p = jnp.pad(w1.astype(jnp.bfloat16), ((0, f1p - (in_c + loc_d)), (0, h1p - f1)))
    b1p = jnp.pad(b1.astype(jnp.float32).reshape(1, -1), ((0, 0), (0, h1p - f1)))
    w2a = jnp.pad(w2[:f1].astype(jnp.bfloat16), ((0, h1p - f1), (0, op - out_c)))
    w2b = jnp.pad(w2[f1:].astype(jnp.bfloat16), ((0, lp - loc_d), (0, op - out_c)))
    b2p = jnp.pad(b2.astype(jnp.float32).reshape(1, -1), ((0, 0), (0, op - out_c)))

    out_p = pl.pallas_call(
        _fused_gcn_kernel,
        out_shape=jax.ShapeDtypeStruct((np_, op), jnp.float32),
        in_specs=[pl.BlockSpec(memory_space=pltpu.MemorySpace.VMEM)] * 8,
        out_specs=pl.BlockSpec(memory_space=pltpu.MemorySpace.VMEM),
    )(a_hat, x1, w1p, b1p, le, w2a, w2b, b2p)
    return out_p[:n, :out_c]


# ---------------------------------------------------------------------------
# Large-graph path: tiled matmul with VMEM-resident RHS and f32 K-accumulator
# ---------------------------------------------------------------------------
def _matmul_rhs_resident_kernel(a_ref, b_ref, bias_ref, o_ref, acc_ref, *,
                                tk, apply_relu):
    kk = pl.program_id(1)

    @pl.when(kk == 0)
    def _():
        acc_ref[...] = jnp.zeros_like(acc_ref)

    start = pl.multiple_of(kk * tk, tk)
    acc_ref[...] += jnp.dot(a_ref[...], b_ref[pl.ds(start, tk), :],
                            preferred_element_type=jnp.float32)

    @pl.when(kk == pl.num_programs(1) - 1)
    def _():
        out = acc_ref[...] + bias_ref[...]
        if apply_relu:                        # static Python flag
            out = jnp.maximum(out, 0.0)
        o_ref[...] = out.astype(o_ref.dtype)


def _matmul_rhs_resident(a, b, bias, *, apply_relu, tm, tk, out_dtype):
    """maybe_relu(a @ b + bias) with the small RHS fully VMEM-resident.

    a: (M, K) bf16 tile-aligned, b: (K, F) bf16, bias: (1, F) f32 or None.
    Grid (M//tm, K//tk); RHS index_map is constant -> DMA'd once, sliced
    in-kernel per K step; f32 accumulator lives in VMEM scratch.
    """
    m, k = a.shape
    k2, fo = b.shape
    assert k == k2 and m % tm == 0 and k % tk == 0
    if bias is None:
        bias = jnp.zeros((1, fo), jnp.float32)

    kernel = functools.partial(_matmul_rhs_resident_kernel, tk=tk,
                               apply_relu=apply_relu)
    return pl.pallas_call(
        kernel,
        out_shape=jax.ShapeDtypeStruct((m, fo), out_dtype),
        grid_spec=pltpu.PrefetchScalarGridSpec(
            num_scalar_prefetch=0,
            grid=(m // tm, k // tk),
            in_specs=[
                pl.BlockSpec((tm, tk), lambda i, kk: (i, kk)),
                pl.BlockSpec((k, fo), lambda i, kk: (0, 0)),    # resident RHS
                pl.BlockSpec((1, fo), lambda i, kk: (0, 0)),
            ],
            out_specs=pl.BlockSpec((tm, fo), lambda i, kk: (i, 0)),
            scratch_shapes=[pltpu.VMEM((tm, fo), jnp.float32)],
        ),
        compiler_params=pltpu.CompilerParams(
            dimension_semantics=("parallel", "arbitrary"),
            vmem_limit_bytes=32 * 1024 * 1024),
    )(a, b, bias)


@jax.jit
def _forward_tiled(edge_indices, features, location_embedding, w1, b1, w2, b2):
    n, in_c = features.shape
    loc_d = location_embedding.shape[1]
    f1 = w1.shape[1]
    out_c = w2.shape[1]

    t = 512 if n > 2048 else 256               # A_hat row/col tile
    np_ = _round_up(n, t)
    f1p = _round_up(in_c + loc_d, 128)
    h1p = _round_up(f1, 128)
    lp = _round_up(loc_d, 128)
    op = _round_up(out_c, 128)

    # A_hat built at padded shape, cast to bf16 ONCE, reused by both layers.
    a_hat = _build_normalized_adjacency(edge_indices, n, np_).astype(jnp.bfloat16)
    x1 = jnp.pad(
        jnp.concatenate([features, location_embedding], axis=-1).astype(jnp.bfloat16),
        ((0, np_ - n), (0, f1p - (in_c + loc_d))))
    le = jnp.pad(location_embedding.astype(jnp.bfloat16),
                 ((0, np_ - n), (0, lp - loc_d)))
    w1p = jnp.pad(w1.astype(jnp.bfloat16), ((0, f1p - (in_c + loc_d)), (0, h1p - f1)))
    b1p = jnp.pad(b1.astype(jnp.float32).reshape(1, -1), ((0, 0), (0, h1p - f1)))
    # W2 laid out to match concat([h_padded, le_padded], axis=-1)
    w2p = jnp.zeros((h1p + lp, op), jnp.bfloat16)
    w2p = w2p.at[:f1, :out_c].set(w2[:f1].astype(jnp.bfloat16))
    w2p = w2p.at[h1p:h1p + loc_d, :out_c].set(w2[f1:].astype(jnp.bfloat16))
    b2p = jnp.pad(b2.astype(jnp.float32).reshape(1, -1), ((0, 0), (0, op - out_c)))

    # layer 1: relu(A_hat @ (X1 @ W1) + b1); intermediates kept in bf16
    xw1 = _matmul_rhs_resident(x1, w1p, None, apply_relu=False, tm=t, tk=f1p,
                               out_dtype=jnp.bfloat16)
    h = _matmul_rhs_resident(a_hat, xw1, b1p, apply_relu=True, tm=t, tk=t,
                             out_dtype=jnp.bfloat16)
    # TODO(synk): training-mode dropout (pltpu.prng_seed + pltpu.stateful_bernoulli).
    # layer 2: A_hat @ (concat(h, le) @ W2) + b2
    x2 = jnp.concatenate([h, le], axis=-1)
    xw2 = _matmul_rhs_resident(x2, w2p, None, apply_relu=False, tm=t, tk=h1p + lp,
                               out_dtype=jnp.bfloat16)
    out = _matmul_rhs_resident(a_hat, xw2, b2p, apply_relu=False, tm=t, tk=t,
                               out_dtype=jnp.float32)
    return out[:n, :out_c]


# ---------------------------------------------------------------------------
# Public forward (matches Positional_GCN.forward in eval mode)
# ---------------------------------------------------------------------------
def positional_gcn_forward(edge_indices, features, location_embedding, params,
                           dropout=0.0, training=False, force_tiled=False):
    # TODO(synk): dropout/training handled only for eval mode (identity).
    w1, b1, w2, b2 = params["w1"], params["b1"], params["w2"], params["b2"]
    n = features.shape[0]
    if (not force_tiled) and n <= _FUSED_MAX_NODES:
        return _forward_fused(edge_indices, features, location_embedding,
                              w1, b1, w2, b2)
    return _forward_tiled(edge_indices, features, location_embedding,
                          w1, b1, w2, b2)


# ---------------------------------------------------------------------------
# References
# ---------------------------------------------------------------------------
def _reference_f32(edge_indices, features, location_embedding, params):
    n = features.shape[0]
    a = _build_normalized_adjacency(edge_indices, n, n)
    x = jnp.concatenate([features, location_embedding], axis=-1)
    h = jnp.maximum(a @ (x @ params["w1"]) + params["b1"], 0.0)
    x2 = jnp.concatenate([h, location_embedding], axis=-1)
    return a @ (x2 @ params["w2"]) + params["b2"]


def _reference_bf16(edge_indices, features, location_embedding, params):
    """jnp reference mirroring the kernels' bf16-operand / f32-accumulation math."""
    n = features.shape[0]
    a = _build_normalized_adjacency(edge_indices, n, n).astype(jnp.bfloat16)
    x = jnp.concatenate([features, location_embedding], axis=-1).astype(jnp.bfloat16)
    le = location_embedding.astype(jnp.bfloat16)
    xw1 = jnp.dot(x, params["w1"].astype(jnp.bfloat16),
                  preferred_element_type=jnp.float32)
    h = jnp.dot(a, xw1.astype(jnp.bfloat16),
                preferred_element_type=jnp.float32) + params["b1"]
    h = jnp.maximum(h, 0.0)
    x2 = jnp.concatenate([h.astype(jnp.bfloat16), le], axis=-1)
    xw2 = jnp.dot(x2, params["w2"].astype(jnp.bfloat16),
                  preferred_element_type=jnp.float32)
    return jnp.dot(a, xw2.astype(jnp.bfloat16),
                   preferred_element_type=jnp.float32) + params["b2"]


if __name__ == "__main__":
    key = jax.random.PRNGKey(0)

    in_channels = 16
    location_embedding_dim = 4
    filters_1 = 32
    filters_2 = 16            # stored by the module but unused in forward
    out_channels = 8
    dropout = 0.5             # identity in eval mode

    fan1 = in_channels + location_embedding_dim
    fan2 = filters_1 + location_embedding_dim
    kw1, kw2, kb1, kb2, kg1, kg2 = jax.random.split(key, 6)
    params = {
        "w1": jax.random.normal(kw1, (fan1, filters_1), jnp.float32) / jnp.sqrt(fan1),
        "b1": 0.1 * jax.random.normal(kb1, (filters_1,), jnp.float32),
        "w2": jax.random.normal(kw2, (fan2, out_channels), jnp.float32) / jnp.sqrt(fan2),
        "b2": 0.1 * jax.random.normal(kb2, (out_channels,), jnp.float32),
    }

    def make_graph(k, n, e):
        kf, kl, ks, kd = jax.random.split(k, 4)
        feats = jax.random.normal(kf, (n, in_channels), jnp.float32)
        le = jax.random.normal(kl, (n, location_embedding_dim), jnp.float32)
        src = jax.random.randint(ks, (e,), 0, n)
        dst = jax.random.randint(kd, (e,), 0, n)
        return jnp.stack([src, dst]).astype(jnp.int32), feats, le

    # 1) Small graph -> fully fused single-kernel path (the module's real scale).
    edges, feats, le = make_graph(kg1, 8, 16)
    out = positional_gcn_forward(edges, feats, le, params, dropout=dropout,
                                 training=False)
    out = jax.block_until_ready(out)
    assert out.shape == (8, out_channels)
    np.testing.assert_allclose(np.asarray(out),
                               np.asarray(_reference_bf16(edges, feats, le, params)),
                               rtol=1e-2, atol=1e-2)
    np.testing.assert_allclose(np.asarray(out),
                               np.asarray(_reference_f32(edges, feats, le, params)),
                               rtol=1e-1, atol=1e-1)

    # 2) Larger graph, forced through the tiled/pipelined path (exercises the
    #    gridded K-accumulation kernels with multiple row/K tiles).
    edges2, feats2, le2 = make_graph(kg2, 300, 900)
    out2 = positional_gcn_forward(edges2, feats2, le2, params, dropout=dropout,
                                  training=False, force_tiled=True)
    out2 = jax.block_until_ready(out2)
    assert out2.shape == (300, out_channels)
    np.testing.assert_allclose(np.asarray(out2),
                               np.asarray(_reference_bf16(edges2, feats2, le2, params)),
                               rtol=1e-2, atol=1e-2)
    np.testing.assert_allclose(np.asarray(out2),
                               np.asarray(_reference_f32(edges2, feats2, le2, params)),
                               rtol=1e-1, atol=1e-1)

    print("KERNEL_OK")
</pallas_src>

<mosaic_0001>
module attributes {stable_mosaic.version = 11 : i64} {
  func.func private @main(%arg0: i32) attributes {dimension_semantics = [#tpu.dimension_semantics<core_parallel>], iteration_bounds = array<i64: 2>, tpu.core_type = #tpu.core_type<sc_scalar_subcore>, window_params = []} {
    return
  }
}

module attributes {stable_mosaic.version = 11 : i64} {
  func.func private @main(%arg0: i32) attributes {dimension_semantics = [#tpu.dimension_semantics<core_parallel>], iteration_bounds = array<i64: 2>, tpu.core_type = #tpu.core_type<sc_scalar_subcore>, window_params = []} {
    return
  }
}

module attributes {stable_mosaic.version = 11 : i64} {
  func.func @_fused_gcn_kernel(%arg0: memref<128x128xbf16, #tpu.memory_space<vmem>>, %arg1: memref<128x128xbf16, #tpu.memory_space<vmem>>, %arg2: memref<128x128xbf16, #tpu.memory_space<vmem>>, %arg3: memref<1x128xf32, #tpu.memory_space<vmem>>, %arg4: memref<128x128xbf16, #tpu.memory_space<vmem>>, %arg5: memref<128x128xbf16, #tpu.memory_space<vmem>>, %arg6: memref<128x128xbf16, #tpu.memory_space<vmem>>, %arg7: memref<1x128xf32, #tpu.memory_space<vmem>>, %arg8: memref<128x128xf32, #tpu.memory_space<vmem>>) attributes {dimension_semantics = [], scalar_prefetch = 0 : i64, scratch_operands = 0 : i64, tpu.core_type = #tpu.core_type<tc>} {
    %c0 = arith.constant 0 : index
    %c0_0 = arith.constant 0 : index
    %0 = vector.load %arg0[%c0, %c0_0] : memref<128x128xbf16, #tpu.memory_space<vmem>>, vector<128x128xbf16>
    %c0_1 = arith.constant 0 : index
    %c0_2 = arith.constant 0 : index
    %1 = vector.load %arg1[%c0_1, %c0_2] : memref<128x128xbf16, #tpu.memory_space<vmem>>, vector<128x128xbf16>
    %c0_3 = arith.constant 0 : index
    %c0_4 = arith.constant 0 : index
    %2 = vector.load %arg2[%c0_3, %c0_4] : memref<128x128xbf16, #tpu.memory_space<vmem>>, vector<128x128xbf16>
    %cst = arith.constant dense<0.000000e+00> : vector<128x128xf32>
    %3 = tpu.matmul %1, %2, %cst {dimension_numbers = #tpu.dot_dimension_numbers<[1], [0], [0], [1], [0, 0, 1, 1], [], []>} : vector<128x128xbf16>, vector<128x128xbf16>, vector<128x128xf32> -> vector<128x128xf32>
    %4 = arith.truncf %3 : vector<128x128xf32> to vector<128x128xbf16>
    %cst_5 = arith.constant dense<0.000000e+00> : vector<128x128xf32>
    %5 = tpu.matmul %0, %4, %cst_5 {dimension_numbers = #tpu.dot_dimension_numbers<[1], [0], [0], [1], [0, 0, 1, 1], [], []>} : vector<128x128xbf16>, vector<128x128xbf16>, vector<128x128xf32> -> vector<128x128xf32>
    %c0_6 = arith.constant 0 : index
    %c0_7 = arith.constant 0 : index
    %6 = vector.load %arg3[%c0_6, %c0_7] : memref<1x128xf32, #tpu.memory_space<vmem>>, vector<1x128xf32>
    %7 = vector.broadcast %6 : vector<1x128xf32> to vector<128x128xf32>
    %8 = arith.addf %5, %7 : vector<128x128xf32>
    %cst_8 = arith.constant 0.000000e+00 : f32
    %9 = vector.broadcast %cst_8 : f32 to vector<128x128xf32>
    %10 = arith.maximumf %8, %9 : vector<128x128xf32>
    %11 = arith.truncf %10 : vector<128x128xf32> to vector<128x128xbf16>
    %c0_9 = arith.constant 0 : index
    %c0_10 = arith.constant 0 : index
    %12 = vector.load %arg5[%c0_9, %c0_10] : memref<128x128xbf16, #tpu.memory_space<vmem>>, vector<128x128xbf16>
    %cst_11 = arith.constant dense<0.000000e+00> : vector<128x128xf32>
    %13 = tpu.matmul %11, %12, %cst_11 {dimension_numbers = #tpu.dot_dimension_numbers<[1], [0], [0], [1], [0, 0, 1, 1], [], []>} : vector<128x128xbf16>, vector<128x128xbf16>, vector<128x128xf32> -> vector<128x128xf32>
    %c0_12 = arith.constant 0 : index
    %c0_13 = arith.constant 0 : index
    %14 = vector.load %arg4[%c0_12, %c0_13] : memref<128x128xbf16, #tpu.memory_space<vmem>>, vector<128x128xbf16>
    %c0_14 = arith.constant 0 : index
    %c0_15 = arith.constant 0 : index
    %15 = vector.load %arg6[%c0_14, %c0_15] : memref<128x128xbf16, #tpu.memory_space<vmem>>, vector<128x128xbf16>
    %cst_16 = arith.constant dense<0.000000e+00> : vector<128x128xf32>
    %16 = tpu.matmul %14, %15, %cst_16 {dimension_numbers = #tpu.dot_dimension_numbers<[1], [0], [0], [1], [0, 0, 1, 1], [], []>} : vector<128x128xbf16>, vector<128x128xbf16>, vector<128x128xf32> -> vector<128x128xf32>
    %17 = arith.addf %13, %16 : vector<128x128xf32>
    %18 = arith.truncf %17 : vector<128x128xf32> to vector<128x128xbf16>
    %cst_17 = arith.constant dense<0.000000e+00> : vector<128x128xf32>
    %19 = tpu.matmul %0, %18, %cst_17 {dimension_numbers = #tpu.dot_dimension_numbers<[1], [0], [0], [1], [0, 0, 1, 1], [], []>} : vector<128x128xbf16>, vector<128x128xbf16>, vector<128x128xf32> -> vector<128x128xf32>
    %c0_18 = arith.constant 0 : index
    %c0_19 = arith.constant 0 : index
    %20 = vector.load %arg7[%c0_18, %c0_19] : memref<1x128xf32, #tpu.memory_space<vmem>>, vector<1x128xf32>
    %21 = vector.broadcast %20 : vector<1x128xf32> to vector<128x128xf32>
    %22 = arith.addf %19, %21 : vector<128x128xf32>
    %c0_20 = arith.constant 0 : index
    %c0_21 = arith.constant 0 : index
    %23 = vector.load %arg8[%c0_20, %c0_21] : memref<128x128xf32, #tpu.memory_space<vmem>>, vector<128x128xf32>
    tpu.vector_store %arg8[%c0_20, %c0_21], %22 {strides = array<i32>} : memref<128x128xf32, #tpu.memory_space<vmem>>, vector<128x128xf32>,
    return
  }
}

</mosaic_0001>

<llo_original>
// kernel: _forward_fused.1
$region0: #{_forward_fused.1}
  #allocation0 [shape = 'u32[]', space=smem, size = 0x4, offset = 0x4, fixed_abs, tag = 'smem constant byte address 0x4 - core index']
  #allocation1 [shape = 'u32[144,128]{1,0:T(1,128)}', space=vmem, size = 0x12000, scoped, tag = 'internal scratch']
  %s0 = inlined_call_operand.vmem [shape: bf16[128,128], index: 0, kind: input, shape index: {}]
  %s1 = inlined_call_operand.vmem [shape: bf16[128,128], index: 1, kind: input, shape index: {}]
  %s2 = inlined_call_operand.vmem [shape: bf16[128,128], index: 2, kind: input, shape index: {}]
  %s3 = inlined_call_operand.vmem [shape: f32[1,128], index: 3, kind: input, shape index: {}]
  %s4 = inlined_call_operand.vmem [shape: bf16[128,128], index: 4, kind: input, shape index: {}]
  %s5 = inlined_call_operand.vmem [shape: bf16[128,128], index: 5, kind: input, shape index: {}]
  %s6 = inlined_call_operand.vmem [shape: bf16[128,128], index: 6, kind: input, shape index: {}]
  %s7 = inlined_call_operand.vmem [shape: f32[1,128], index: 7, kind: input, shape index: {}]
  %s8 = inlined_call_operand.vmem [shape: f32[128,128], index: 8, kind: output, shape index: {}]
  %s9 = sld [smem:[#allocation0]]
  $region42: #{_forward_fused.1} parent=0
    _
  %s11 = ssub.s32 1, %s9
  %s12 = scalar_select 0, %s11, %s9
  // Predicated region
  $region2: #{_forward_fused.1} parent=0 // pred_check
    _
  $region3: #{_forward_fused.1} parent=0 // pred_check_branch
    %14 = sbr.rel (0) target = $region5
  $region4: #{_forward_fused.1} parent=0 // pred_region
    _
  $region5: #{_forward_fused.1} parent=0 // pred_fallthru
    _
  // Predicated region
  $region6: #{_forward_fused.1} parent=0 // pred_check
    _
  $region7: #{_forward_fused.1} parent=0 // pred_check_branch
    %16 = sbr.rel (0) target = $region9
  $region8: #{_forward_fused.1} parent=0 // pred_region
    _
  $region9: #{_forward_fused.1} parent=0 // pred_fallthru
    _
  // Predicated region
  $region10: #{_forward_fused.1} parent=0 // pred_check
    _
  $region11: #{_forward_fused.1} parent=0 // pred_check_branch
    %18 = sbr.rel (0) target = $region13
  $region12: #{_forward_fused.1} parent=0 // pred_region
    _
  $region13: #{_forward_fused.1} parent=0 // pred_fallthru
    _
  // Predicated region
  $region14: #{_forward_fused.1} parent=0 // pred_check
    _
  $region15: #{_forward_fused.1} parent=0 // pred_check_branch
    %20 = sbr.rel (0) target = $region17
  $region16: #{_forward_fused.1} parent=0 // pred_region
    _
  $region17: #{_forward_fused.1} parent=0 // pred_fallthru
    _
  // Predicated region
  $region18: #{_forward_fused.1} parent=0 // pred_check
    _
  $region19: #{_forward_fused.1} parent=0 // pred_check_branch
    %22 = sbr.rel (0) target = $region21
  $region20: #{_forward_fused.1} parent=0 // pred_region
    _
  $region21: #{_forward_fused.1} parent=0 // pred_fallthru
    _
  // Predicated region
  $region22: #{_forward_fused.1} parent=0 // pred_check
    _
  $region23: #{_forward_fused.1} parent=0 // pred_check_branch
    %24 = sbr.rel (0) target = $region25
  $region24: #{_forward_fused.1} parent=0 // pred_region
    _
  $region25: #{_forward_fused.1} parent=0 // pred_fallthru
    _
  // Predicated region
  $region26: #{_forward_fused.1} parent=0 // pred_check
    _
  $region27: #{_forward_fused.1} parent=0 // pred_check_branch
    %26 = sbr.rel (0) target = $region29
  $region28: #{_forward_fused.1} parent=0 // pred_region
    _
  $region29: #{_forward_fused.1} parent=0 // pred_fallthru
    _
  // Predicated region
  $region30: #{_forward_fused.1} parent=0 // pred_check
    _
  $region31: #{_forward_fused.1} parent=0 // pred_check_branch
    %28 = sbr.rel (0) target = $region33
  $region32: #{_forward_fused.1} parent=0 // pred_region
    _
  $region33: #{_forward_fused.1} parent=0 // pred_fallthru
    _
  %v30 = vld [vmem:[%s0] sm:$0xf]
  %v31 = vld [vmem:[%s0 + $0x4] sm:$0xf]
  %v32 = vld [vmem:[%s0 + $0x8] sm:$0xf]
  %v33 = vld [vmem:[%s0 + $0xc] sm:$0xf]
  %v34 = vld [vmem:[%s0 + $0x10] sm:$0xf]
  %v35 = vld [vmem:[%s0 + $0x14] sm:$0xf]
  %v36 = vld [vmem:[%s0 + $0x18] sm:$0xf]
  %v37 = vld [vmem:[%s0 + $0x1c] sm:$0xf]
  %v38 = vld [vmem:[%s0 + $0x20] sm:$0xf]
  %v39 = vld [vmem:[%s0 + $0x24] sm:$0xf]
  %v40 = vld [vmem:[%s0 + $0x28] sm:$0xf]
  %v41 = vld [vmem:[%s0 + $0x2c] sm:$0xf]
  %v42 = vld [vmem:[%s0 + $0x30] sm:$0xf]
  %v43 = vld [vmem:[%s0 + $0x34] sm:$0xf]
  %v44 = vld [vmem:[%s0 + $0x38] sm:$0xf]
  %v45 = vld [vmem:[%s0 + $0x3c] sm:$0xf]
  %v46 = vld [vmem:[%s1] sm:$0xf]
  %v47 = vld [vmem:[%s1 + $0x4] sm:$0xf]
  %v48 = vld [vmem:[%s1 + $0x8] sm:$0xf]
  %v49 = vld [vmem:[%s1 + $0xc] sm:$0xf]
  %v50 = vld [vmem:[%s1 + $0x10] sm:$0xf]
  %v51 = vld [vmem:[%s1 + $0x14] sm:$0xf]
  %v52 = vld [vmem:[%s1 + $0x18] sm:$0xf]
  %v53 = vld [vmem:[%s1 + $0x1c] sm:$0xf]
  %v54 = vld [vmem:[%s1 + $0x20] sm:$0xf]
  %v55 = vld [vmem:[%s1 + $0x24] sm:$0xf]
  %v56 = vld [vmem:[%s1 + $0x28] sm:$0xf]
  %v57 = vld [vmem:[%s1 + $0x2c] sm:$0xf]
  %v58 = vld [vmem:[%s1 + $0x30] sm:$0xf]
  %v59 = vld [vmem:[%s1 + $0x34] sm:$0xf]
  %v60 = vld [vmem:[%s1 + $0x38] sm:$0xf]
  %v61 = vld [vmem:[%s1 + $0x3c] sm:$0xf]
  %v62 = vld [vmem:[%s2] sm:$0xf]
  %v63 = vld [vmem:[%s2 + $0x4] sm:$0xf]
  %v64 = vld [vmem:[%s2 + $0x8] sm:$0xf]
  %v65 = vld [vmem:[%s2 + $0xc] sm:$0xf]
  %v66 = vld [vmem:[%s2 + $0x10] sm:$0xf]
  %v67 = vld [vmem:[%s2 + $0x14] sm:$0xf]
  %v68 = vld [vmem:[%s2 + $0x18] sm:$0xf]
  %v69 = vld [vmem:[%s2 + $0x1c] sm:$0xf]
  %v70 = vld [vmem:[%s2 + $0x20] sm:$0xf]
  %v71 = vld [vmem:[%s2 + $0x24] sm:$0xf]
  %v72 = vld [vmem:[%s2 + $0x28] sm:$0xf]
  %v73 = vld [vmem:[%s2 + $0x2c] sm:$0xf]
  %v74 = vld [vmem:[%s2 + $0x30] sm:$0xf]
  %v75 = vld [vmem:[%s2 + $0x34] sm:$0xf]
  %v76 = vld [vmem:[%s2 + $0x38] sm:$0xf]
  %v77 = vld [vmem:[%s2 + $0x3c] sm:$0xf]
  %v94 = vunpack.c.l.b16 %v46
  %v95 = vunpack.c.l.b16 %v47
  %v96 = vunpack.c.l.b16 %v48
  %v97 = vunpack.c.l.b16 %v49
  %v98 = vunpack.c.l.b16 %v50
  %v99 = vunpack.c.l.b16 %v51
  %v100 = vunpack.c.l.b16 %v52
  %v101 = vunpack.c.l.b16 %v53
  %v102 = vunpack.c.l.b16 %v54
  %v103 = vunpack.c.l.b16 %v55
  %v104 = vunpack.c.l.b16 %v56
  %v105 = vunpack.c.l.b16 %v57
  %v106 = vunpack.c.l.b16 %v58
  %v107 = vunpack.c.l.b16 %v59
  %v108 = vunpack.c.l.b16 %v60
  %v109 = vunpack.c.l.b16 %v61
  %v110 = vpack.c.b16 %v95, %v94
  %v111 = vpack.c.b16 %v97, %v96
  %v112 = vpack.c.b16 %v99, %v98
  %v113 = vpack.c.b16 %v101, %v100
  %v114 = vpack.c.b16 %v103, %v102
  %v115 = vpack.c.b16 %v105, %v104
  %v116 = vpack.c.b16 %v107, %v106
  %v117 = vpack.c.b16 %v109, %v108
  %v142 = vunpack.c.l.b16 %v62
  %v143 = vunpack.c.l.b16 %v63
  %v144 = vunpack.c.l.b16 %v64
  %v145 = vunpack.c.l.b16 %v65
  %v146 = vunpack.c.l.b16 %v66
  %v147 = vunpack.c.l.b16 %v67
  %v148 = vunpack.c.l.b16 %v68
  %v149 = vunpack.c.l.b16 %v69
  %v150 = vunpack.c.l.b16 %v70
  %v151 = vunpack.c.l.b16 %v71
  %v152 = vunpack.c.l.b16 %v72
  %v153 = vunpack.c.l.b16 %v73
  %v154 = vunpack.c.l.b16 %v74
  %v155 = vunpack.c.l.b16 %v75
  %v156 = vunpack.c.l.b16 %v76
  %v157 = vunpack.c.l.b16 %v77
  %v158 = vpack.c.b16 %v143, %v142
  %v159 = vpack.c.b16 %v145, %v144
  %v160 = vpack.c.b16 %v147, %v146
  %v161 = vpack.c.b16 %v149, %v148
  %v162 = vpack.c.b16 %v151, %v150
  %v163 = vpack.c.b16 %v153, %v152
  %v164 = vpack.c.b16 %v155, %v154
  %v165 = vpack.c.b16 %v157, %v156
  %174 = vmatprep.subr.bf16.mxu0 0
  %175 = vmatpush1.bf16.msra.mxu0 %v165
  %176 = vmatprep.subr.bf16.mxu0 0
  %177 = vmatpush1.bf16.msra.mxu0 %v164
  %178 = vmatprep.subr.bf16.mxu0 0
  %179 = vmatpush1.bf16.msra.mxu0 %v163
  %180 = vmatprep.subr.bf16.mxu0 0
  %181 = vmatpush1.bf16.msra.mxu0 %v162
  %182 = vmatprep.subr.bf16.mxu0 0
  %183 = vmatpush1.bf16.msra.mxu0 %v161
  %184 = vmatprep.subr.bf16.mxu0 0
  %185 = vmatpush1.bf16.msra.mxu0 %v160
  %186 = vmatprep.subr.bf16.mxu0 0
  %187 = vmatpush1.bf16.msra.mxu0 %v159
  %188 = vmatprep.subr.bf16.mxu0 0
  %189 = vmatpush1.bf16.msra.mxu0 %v158
  %190 = vmatprep.subr.bf16.mxu0 0
  %191 = vmatpush2.bf16.msra.mxu0 0
  %192 = vmatprep.subr.bf16.mxu0 0
  %193 = vmatpush2.bf16.msra.mxu0 0
  %194 = vmatprep.subr.bf16.mxu0 0
  %195 = vmatpush2.bf16.msra.mxu0 0
  %196 = vmatprep.subr.bf16.mxu0 0
  %197 = vmatpush2.bf16.msra.mxu0 0
  %198 = vmatprep.subr.bf16.mxu0 0
  %199 = vmatpush2.bf16.msra.mxu0 0
  %200 = vmatprep.subr.bf16.mxu0 0
  %201 = vmatpush2.bf16.msra.mxu0 0
  %202 = vmatprep.subr.bf16.mxu0 0
  %203 = vmatpush2.bf16.msra.mxu0 0
  %204 = vmatprep.subr.bf16.mxu0 0
  %205 = vmatpush2.bf16.msra.mxu0 0
  %206 = vmatprep.mubr.bf16.mxu0 0
  %207 = vmatmul.mubr.bf16.gmra.mxu0 %v110
  %v208 = vpop.f32.mrf.mxu0
  %v209 = vadd.f32 0.0, %v208
  %v210 = vpop.f32.mrf.mxu0
  %v211 = vpop.f32.mrf.mxu0
  %v212 = vadd.f32 0.0, %v211
  %v213 = vpop.f32.mrf.mxu0
  %214 = vmatprep.mubr.bf16.mxu0 0
  %215 = vmatmul.mubr.bf16.gmra.mxu0 %v111
  %v216 = vpop.f32.mrf.mxu0
  %v217 = vadd.f32 0.0, %v216
  %v218 = vpop.f32.mrf.mxu0
  %v219 = vpop.f32.mrf.mxu0
  %v220 = vadd.f32 0.0, %v219
  %v221 = vpop.f32.mrf.mxu0
  %222 = vmatprep.mubr.bf16.mxu0 0
  %223 = vmatmul.mubr.bf16.gmra.mxu0 %v112
  %v224 = vpop.f32.mrf.mxu0
  %v225 = vadd.f32 0.0, %v224
  %v226 = vpop.f32.mrf.mxu0
  %v227 = vpop.f32.mrf.mxu0
  %v228 = vadd.f32 0.0, %v227
  %v229 = vpop.f32.mrf.mxu0
  %230 = vmatprep.mubr.bf16.mxu0 0
  %231 = vmatmul.mubr.bf16.gmra.mxu0 %v113
  %v232 = vpop.f32.mrf.mxu0
  %v233 = vadd.f32 0.0, %v232
  %v234 = vpop.f32.mrf.mxu0
  %v235 = vpop.f32.mrf.mxu0
  %v236 = vadd.f32 0.0, %v235
  %v237 = vpop.f32.mrf.mxu0
  %238 = vmatprep.mubr.bf16.mxu0 0
  %239 = vmatmul.mubr.bf16.gmra.mxu0 %v114
  %v240 = vpop.f32.mrf.mxu0
  %v241 = vadd.f32 0.0, %v240
  %v242 = vpop.f32.mrf.mxu0
  %v243 = vpop.f32.mrf.mxu0
  %v244 = vadd.f32 0.0, %v243
  %v245 = vpop.f32.mrf.mxu0
  %246 = vmatprep.mubr.bf16.mxu0 0
  %247 = vmatmul.mubr.bf16.gmra.mxu0 %v115
  %v248 = vpop.f32.mrf.mxu0
  %v249 = vadd.f32 0.0, %v248
  %v250 = vpop.f32.mrf.mxu0
  %v251 = vpop.f32.mrf.mxu0
  %v252 = vadd.f32 0.0, %v251
  %v253 = vpop.f32.mrf.mxu0
  %254 = vmatprep.mubr.bf16.mxu0 0
  %255 = vmatmul.mubr.bf16.gmra.mxu0 %v116
  %v256 = vpop.f32.mrf.mxu0
  %v257 = vadd.f32 0.0, %v256
  %v258 = vpop.f32.mrf.mxu0
  %v259 = vpop.f32.mrf.mxu0
  %v260 = vadd.f32 0.0, %v259
  %v261 = vpop.f32.mrf.mxu0
  %262 = vmatprep.mubr.bf16.mxu0 0
  %263 = vmatmul.mubr.bf16.gmra.mxu0 %v117
  %v264 = vpop.f32.mrf.mxu0
  %v265 = vadd.f32 0.0, %v264
  %v266 = vpop.f32.mrf.mxu0
  %v267 = vpop.f32.mrf.mxu0
  %v268 = vadd.f32 0.0, %v267
  %v269 = vpop.f32.mrf.mxu0
  %270 = vdwg.mxu0
  %v271 = vpack.c.bf16 %v212, %v209
  %v272 = vpack.c.bf16 %v220, %v217
  %v273 = vpack.c.bf16 %v228, %v225
  %v274 = vpack.c.bf16 %v236, %v233
  %v275 = vpack.c.bf16 %v244, %v241
  %v276 = vpack.c.bf16 %v252, %v249
  %v277 = vpack.c.bf16 %v260, %v257
  %v278 = vpack.c.bf16 %v268, %v265
  %v279 = vld [vmem:[%s3] sm:$0x1]
  %v281 = vlaneseq
  %v282 = vshrl.u32 %v281, 7
  %v283 = vsub.s32 0, %v282
  %v284 = vrot.slane %v279, %v283
  %v302 = vunpack.c.l.b16 %v30
  %v303 = vunpack.c.l.b16 %v31
  %v304 = vunpack.c.l.b16 %v32
  %v305 = vunpack.c.l.b16 %v33
  %v306 = vunpack.c.l.b16 %v34
  %v307 = vunpack.c.l.b16 %v35
  %v308 = vunpack.c.l.b16 %v36
  %v309 = vunpack.c.l.b16 %v37
  %v310 = vunpack.c.l.b16 %v38
  %v311 = vunpack.c.l.b16 %v39
  %v312 = vunpack.c.l.b16 %v40
  %v313 = vunpack.c.l.b16 %v41
  %v314 = vunpack.c.l.b16 %v42
  %v315 = vunpack.c.l.b16 %v43
  %v316 = vunpack.c.l.b16 %v44
  %v317 = vunpack.c.l.b16 %v45
  %v318 = vpack.c.b16 %v303, %v302
  %v319 = vpack.c.b16 %v305, %v304
  %v320 = vpack.c.b16 %v307, %v306
  %v321 = vpack.c.b16 %v309, %v308
  %v322 = vpack.c.b16 %v311, %v310
  %v323 = vpack.c.b16 %v313, %v312
  %v324 = vpack.c.b16 %v315, %v314
  %v325 = vpack.c.b16 %v317, %v316
  %334 = vmatprep.subr.bf16.mxu0 0
  %335 = vmatpush1.bf16.msra.mxu0 %v278
  %336 = vmatprep.subr.bf16.mxu0 0
  %337 = vmatpush1.bf16.msra.mxu0 %v277
  %338 = vmatprep.subr.bf16.mxu0 0
  %339 = vmatpush1.bf16.msra.mxu0 %v276
  %340 = vmatprep.subr.bf16.mxu0 0
  %341 = vmatpush1.bf16.msra.mxu0 %v275
  %342 = vmatprep.subr.bf16.mxu0 0
  %343 = vmatpush1.bf16.msra.mxu0 %v274
  %344 = vmatprep.subr.bf16.mxu0 0
  %345 = vmatpush1.bf16.msra.mxu0 %v273
  %346 = vmatprep.subr.bf16.mxu0 0
  %347 = vmatpush1.bf16.msra.mxu0 %v272
  %348 = vmatprep.subr.bf16.mxu0 0
  %349 = vmatpush1.bf16.msra.mxu0 %v271
  %350 = vmatprep.subr.bf16.mxu0 0
  %351 = vmatpush2.bf16.msra.mxu0 0
  %352 = vmatprep.subr.bf16.mxu0 0
  %353 = vmatpush2.bf16.msra.mxu0 0
  %354 = vmatprep.subr.bf16.mxu0 0
  %355 = vmatpush2.bf16.msra.mxu0 0
  %356 = vmatprep.subr.bf16.mxu0 0
  %357 = vmatpush2.bf16.msra.mxu0 0
  %358 = vmatprep.subr.bf16.mxu0 0
  %359 = vmatpush2.bf16.msra.mxu0 0
  %360 = vmatprep.subr.bf16.mxu0 0
  %361 = vmatpush2.bf16.msra.mxu0 0
  %362 = vmatprep.subr.bf16.mxu0 0
  %363 = vmatpush2.bf16.msra.mxu0 0
  %364 = vmatprep.subr.bf16.mxu0 0
  %365 = vmatpush2.bf16.msra.mxu0 0
  %366 = vmatprep.mubr.bf16.mxu0 0
  %367 = vmatmul.mubr.bf16.gmra.mxu0 %v318
  %v368 = vpop.f32.mrf.mxu0
  %v369 = vadd.f32 %v284, %v368
  %v370 = vpop.f32.mrf.mxu0
  %v371 = vpop.f32.mrf.mxu0
  %v372 = vadd.f32 %v284, %v371
  %v373 = vpop.f32.mrf.mxu0
  %374 = vmatprep.mubr.bf16.mxu0 0
  %375 = vmatmul.mubr.bf16.gmra.mxu0 %v319
  %v376 = vpop.f32.mrf.mxu0
  %v377 = vadd.f32 %v284, %v376
  %v378 = vpop.f32.mrf.mxu0
  %v379 = vpop.f32.mrf.mxu0
  %v380 = vadd.f32 %v284, %v379
  %v381 = vpop.f32.mrf.mxu0
  %382 = vmatprep.mubr.bf16.mxu0 0
  %383 = vmatmul.mubr.bf16.gmra.mxu0 %v320
  %v384 = vpop.f32.mrf.mxu0
  %v385 = vadd.f32 %v284, %v384
  %v386 = vpop.f32.mrf.mxu0
  %v387 = vpop.f32.mrf.mxu0
  %v388 = vadd.f32 %v284, %v387
  %v389 = vpop.f32.mrf.mxu0
  %390 = vmatprep.mubr.bf16.mxu0 0
  %391 = vmatmul.mubr.bf16.gmra.mxu0 %v321
  %v392 = vpop.f32.mrf.mxu0
  %v393 = vadd.f32 %v284, %v392
  %v394 = vpop.f32.mrf.mxu0
  %v395 = vpop.f32.mrf.mxu0
  %v396 = vadd.f32 %v284, %v395
  %v397 = vpop.f32.mrf.mxu0
  %398 = vmatprep.mubr.bf16.mxu0 0
  %399 = vmatmul.mubr.bf16.gmra.mxu0 %v322
  %v400 = vpop.f32.mrf.mxu0
  %v401 = vadd.f32 %v284, %v400
  %v402 = vpop.f32.mrf.mxu0
  %v403 = vpop.f32.mrf.mxu0
  %v404 = vadd.f32 %v284, %v403
  %v405 = vpop.f32.mrf.mxu0
  %406 = vmatprep.mubr.bf16.mxu0 0
  %407 = vmatmul.mubr.bf16.gmra.mxu0 %v323
  %v408 = vpop.f32.mrf.mxu0
  %v409 = vadd.f32 %v284, %v408
  %v410 = vpop.f32.mrf.mxu0
  %v411 = vpop.f32.mrf.mxu0
  %v412 = vadd.f32 %v284, %v411
  %v413 = vpop.f32.mrf.mxu0
  %414 = vmatprep.mubr.bf16.mxu0 0
  %415 = vmatmul.mubr.bf16.gmra.mxu0 %v324
  %v416 = vpop.f32.mrf.mxu0
  %v417 = vadd.f32 %v284, %v416
  %v418 = vpop.f32.mrf.mxu0
  %v419 = vpop.f32.mrf.mxu0
  %v420 = vadd.f32 %v284, %v419
  %v421 = vpop.f32.mrf.mxu0
  %422 = vmatprep.mubr.bf16.mxu0 0
  %423 = vmatmul.mubr.bf16.gmra.mxu0 %v325
  %v424 = vpop.f32.mrf.mxu0
  %v425 = vadd.f32 %v284, %v424
  %v426 = vpop.f32.mrf.mxu0
  %v427 = vpop.f32.mrf.mxu0
  %v428 = vadd.f32 %v284, %v427
  %v429 = vpop.f32.mrf.mxu0
  %430 = vdwg.mxu0
  %v431 = vmax.f32 %v369, 0.0
  %v432 = vmax.f32 %v372, 0.0
  %v433 = vmax.f32 %v377, 0.0
  %v434 = vmax.f32 %v380, 0.0
  %v435 = vmax.f32 %v385, 0.0
  %v436 = vmax.f32 %v388, 0.0
  %v437 = vmax.f32 %v393, 0.0
  %v438 = vmax.f32 %v396, 0.0
  %v439 = vmax.f32 %v401, 0.0
  %v440 = vmax.f32 %v404, 0.0
  %v441 = vmax.f32 %v409, 0.0
  %v442 = vmax.f32 %v412, 0.0
  %v443 = vmax.f32 %v417, 0.0
  %v444 = vmax.f32 %v420, 0.0
  %v445 = vmax.f32 %v425, 0.0
  %v446 = vmax.f32 %v428, 0.0
  %v447 = vpack.c.bf16 %v432, %v431
  %v448 = vpack.c.bf16 %v434, %v433
  %v449 = vpack.c.bf16 %v436, %v435
  %v450 = vpack.c.bf16 %v438, %v437
  %v451 = vpack.c.bf16 %v440, %v439
  %v452 = vpack.c.bf16 %v442, %v441
  %v453 = vpack.c.bf16 %v444, %v443
  %v454 = vpack.c.bf16 %v446, %v445
  %v455 = vld [vmem:[%s5] sm:$0xf]
  %v456 = vld [vmem:[%s5 + $0x4] sm:$0xf]
  %v457 = vld [vmem:[%s5 + $0x8] sm:$0xf]
  %v458 = vld [vmem:[%s5 + $0xc] sm:$0xf]
  %v459 = vld [vmem:[%s5 + $0x10] sm:$0xf]
  %v460 = vld [vmem:[%s5 + $0x14] sm:$0xf]
  %v461 = vld [vmem:[%s5 + $0x18] sm:$0xf]
  %v462 = vld [vmem:[%s5 + $0x1c] sm:$0xf]
  %v463 = vld [vmem:[%s5 + $0x20] sm:$0xf]
  %v464 = vld [vmem:[%s5 + $0x24] sm:$0xf]
  %v465 = vld [vmem:[%s5 + $0x28] sm:$0xf]
  %v466 = vld [vmem:[%s5 + $0x2c] sm:$0xf]
  %v467 = vld [vmem:[%s5 + $0x30] sm:$0xf]
  %v468 = vld [vmem:[%s5 + $0x34] sm:$0xf]
  %v469 = vld [vmem:[%s5 + $0x38] sm:$0xf]
  %v470 = vld [vmem:[%s5 + $0x3c] sm:$0xf]
  %v471 = vld [vmem:[%s4] sm:$0xf]
  %v472 = vld [vmem:[%s4 + $0x4] sm:$0xf]
  %v473 = vld [vmem:[%s4 + $0x8] sm:$0xf]
  %v474 = vld [vmem:[%s4 + $0xc] sm:$0xf]
  %v475 = vld [vmem:[%s4 + $0x10] sm:$0xf]
  %v476 = vld [vmem:[%s4 + $0x14] sm:$0xf]
  %v477 = vld [vmem:[%s4 + $0x18] sm:$0xf]
  %v478 = vld [vmem:[%s4 + $0x1c] sm:$0xf]
  %v479 = vld [vmem:[%s4 + $0x20] sm:$0xf]
  %v480 = vld [vmem:[%s4 + $0x24] sm:$0xf]
  %v481 = vld [vmem:[%s4 + $0x28] sm:$0xf]
  %v482 = vld [vmem:[%s4 + $0x2c] sm:$0xf]
  %v483 = vld [vmem:[%s4 + $0x30] sm:$0xf]
  %v484 = vld [vmem:[%s4 + $0x34] sm:$0xf]
  %v485 = vld [vmem:[%s4 + $0x38] sm:$0xf]
  %v486 = vld [vmem:[%s4 + $0x3c] sm:$0xf]
  %v487 = vld [vmem:[%s6] sm:$0xf]
  %v488 = vld [vmem:[%s6 + $0x4] sm:$0xf]
  %v489 = vld [vmem:[%s6 + $0x8] sm:$0xf]
  %v490 = vld [vmem:[%s6 + $0xc] sm:$0xf]
  %v491 = vld [vmem:[%s6 + $0x10] sm:$0xf]
  %v492 = vld [vmem:[%s6 + $0x14] sm:$0xf]
  %v493 = vld [vmem:[%s6 + $0x18] sm:$0xf]
  %v494 = vld [vmem:[%s6 + $0x1c] sm:$0xf]
  %v495 = vld [vmem:[%s6 + $0x20] sm:$0xf]
  %v496 = vld [vmem:[%s6 + $0x24] sm:$0xf]
  %v497 = vld [vmem:[%s6 + $0x28] sm:$0xf]
  %v498 = vld [vmem:[%s6 + $0x2c] sm:$0xf]
  %v499 = vld [vmem:[%s6 + $0x30] sm:$0xf]
  %v500 = vld [vmem:[%s6 + $0x34] sm:$0xf]
  %v501 = vld [vmem:[%s6 + $0x38] sm:$0xf]
  %v502 = vld [vmem:[%s6 + $0x3c] sm:$0xf]
  %v519 = vunpack.c.l.b16 %v471
  %v520 = vunpack.c.l.b16 %v472
  %v521 = vunpack.c.l.b16 %v473
  %v522 = vunpack.c.l.b16 %v474
  %v523 = vunpack.c.l.b16 %v475
  %v524 = vunpack.c.l.b16 %v476
  %v525 = vunpack.c.l.b16 %v477
  %v526 = vunpack.c.l.b16 %v478
  %v527 = vunpack.c.l.b16 %v479
  %v528 = vunpack.c.l.b16 %v480
  %v529 = vunpack.c.l.b16 %v481
  %v530 = vunpack.c.l.b16 %v482
  %v531 = vunpack.c.l.b16 %v483
  %v532 = vunpack.c.l.b16 %v484
  %v533 = vunpack.c.l.b16 %v485
  %v534 = vunpack.c.l.b16 %v486
  %v535 = vpack.c.b16 %v520, %v519
  %v536 = vpack.c.b16 %v522, %v521
  %v537 = vpack.c.b16 %v524, %v523
  %v538 = vpack.c.b16 %v526, %v525
  %v539 = vpack.c.b16 %v528, %v527
  %v540 = vpack.c.b16 %v530, %v529
  %v541 = vpack.c.b16 %v532, %v531
  %v542 = vpack.c.b16 %v534, %v533
  %v567 = vunpack.c.l.b16 %v487
  %v568 = vunpack.c.l.b16 %v488
  %v569 = vunpack.c.l.b16 %v489
  %v570 = vunpack.c.l.b16 %v490
  %v571 = vunpack.c.l.b16 %v491
  %v572 = vunpack.c.l.b16 %v492
  %v573 = vunpack.c.l.b16 %v493
  %v574 = vunpack.c.l.b16 %v494
  %v575 = vunpack.c.l.b16 %v495
  %v576 = vunpack.c.l.b16 %v496
  %v577 = vunpack.c.l.b16 %v497
  %v578 = vunpack.c.l.b16 %v498
  %v579 = vunpack.c.l.b16 %v499
  %v580 = vunpack.c.l.b16 %v500
  %v581 = vunpack.c.l.b16 %v501
  %v582 = vunpack.c.l.b16 %v502
  %v583 = vpack.c.b16 %v568, %v567
  %v584 = vpack.c.b16 %v570, %v569
  %v585 = vpack.c.b16 %v572, %v571
  %v586 = vpack.c.b16 %v574, %v573
  %v587 = vpack.c.b16 %v576, %v575
  %v588 = vpack.c.b16 %v578, %v577
  %v589 = vpack.c.b16 %v580, %v579
  %v590 = vpack.c.b16 %v582, %v581
  %599 = vmatprep.subr.bf16.mxu0 0
  %600 = vmatpush1.bf16.msra.mxu0 %v590
  %601 = vmatprep.subr.bf16.mxu0 0
  %602 = vmatpush1.bf16.msra.mxu0 %v589
  %603 = vmatprep.subr.bf16.mxu0 0
  %604 = vmatpush1.bf16.msra.mxu0 %v588
  %605 = vmatprep.subr.bf16.mxu0 0
  %606 = vmatpush1.bf16.msra.mxu0 %v587
  %607 = vmatprep.subr.bf16.mxu0 0
  %608 = vmatpush1.bf16.msra.mxu0 %v586
  %609 = vmatprep.subr.bf16.mxu0 0
  %610 = vmatpush1.bf16.msra.mxu0 %v585
  %611 = vmatprep.subr.bf16.mxu0 0
  %612 = vmatpush1.bf16.msra.mxu0 %v584
  %613 = vmatprep.subr.bf16.mxu0 0
  %614 = vmatpush1.bf16.msra.mxu0 %v583
  %615 = vmatprep.subr.bf16.mxu0 0
  %616 = vmatpush2.bf16.msra.mxu0 0
  %617 = vmatprep.subr.bf16.mxu0 0
  %618 = vmatpush2.bf16.msra.mxu0 0
  %619 = vmatprep.subr.bf16.mxu0 0
  %620 = vmatpush2.bf16.msra.mxu0 0
  %621 = vmatprep.subr.bf16.mxu0 0
  %622 = vmatpush2.bf16.msra.mxu0 0
  %623 = vmatprep.subr.bf16.mxu0 0
  %624 = vmatpush2.bf16.msra.mxu0 0
  %625 = vmatprep.subr.bf16.mxu0 0
  %626 = vmatpush2.bf16.msra.mxu0 0
  %627 = vmatprep.subr.bf16.mxu0 0
  %628 = vmatpush2.bf16.msra.mxu0 0
  %629 = vmatprep.subr.bf16.mxu0 0
  %630 = vmatpush2.bf16.msra.mxu0 0
  %631 = vmatprep.mubr.bf16.mxu0 0
  %632 = vmatmul.mubr.bf16.gmra.mxu0 %v535
  %v633 = vpop.f32.mrf.mxu0
  %v634 = vadd.f32 0.0, %v633
  %v635 = vpop.f32.mrf.mxu0
  %v636 = vpop.f32.mrf.mxu0
  %v637 = vadd.f32 0.0, %v636
  %v638 = vpop.f32.mrf.mxu0
  %639 = vmatprep.mubr.bf16.mxu0 0
  %640 = vmatmul.mubr.bf16.gmra.mxu0 %v536
  %v641 = vpop.f32.mrf.mxu0
  %v642 = vadd.f32 0.0, %v641
  %v643 = vpop.f32.mrf.mxu0
  %v644 = vpop.f32.mrf.mxu0
  %v645 = vadd.f32 0.0, %v644
  %v646 = vpop.f32.mrf.mxu0
  %647 = vmatprep.mubr.bf16.mxu0 0
  %648 = vmatmul.mubr.bf16.gmra.mxu0 %v537
  %v649 = vpop.f32.mrf.mxu0
  %v650 = vadd.f32 0.0, %v649
  %v651 = vpop.f32.mrf.mxu0
  %v652 = vpop.f32.mrf.mxu0
  %v653 = vadd.f32 0.0, %v652
  %v654 = vpop.f32.mrf.mxu0
  %655 = vmatprep.mubr.bf16.mxu0 0
  %656 = vmatmul.mubr.bf16.gmra.mxu0 %v538
  %v657 = vpop.f32.mrf.mxu0
  %v658 = vadd.f32 0.0, %v657
  %v659 = vpop.f32.mrf.mxu0
  %v660 = vpop.f32.mrf.mxu0
  %v661 = vadd.f32 0.0, %v660
  %v662 = vpop.f32.mrf.mxu0
  %663 = vmatprep.mubr.bf16.mxu0 0
  %664 = vmatmul.mubr.bf16.gmra.mxu0 %v539
  %v665 = vpop.f32.mrf.mxu0
  %v666 = vadd.f32 0.0, %v665
  %v667 = vpop.f32.mrf.mxu0
  %v668 = vpop.f32.mrf.mxu0
  %v669 = vadd.f32 0.0, %v668
  %v670 = vpop.f32.mrf.mxu0
  %671 = vmatprep.mubr.bf16.mxu0 0
  %672 = vmatmul.mubr.bf16.gmra.mxu0 %v540
  %v673 = vpop.f32.mrf.mxu0
  %v674 = vadd.f32 0.0, %v673
  %v675 = vpop.f32.mrf.mxu0
  %v676 = vpop.f32.mrf.mxu0
  %v677 = vadd.f32 0.0, %v676
  %v678 = vpop.f32.mrf.mxu0
  %679 = vmatprep.mubr.bf16.mxu0 0
  %680 = vmatmul.mubr.bf16.gmra.mxu0 %v541
  %v681 = vpop.f32.mrf.mxu0
  %v682 = vadd.f32 0.0, %v681
  %v683 = vpop.f32.mrf.mxu0
  %v684 = vpop.f32.mrf.mxu0
  %v685 = vadd.f32 0.0, %v684
  %v686 = vpop.f32.mrf.mxu0
  %687 = vmatprep.mubr.bf16.mxu0 0
  %688 = vmatmul.mubr.bf16.gmra.mxu0 %v542
  %v689 = vpop.f32.mrf.mxu0
  %v690 = vadd.f32 0.0, %v689
  %v691 = vpop.f32.mrf.mxu0
  %v692 = vpop.f32.mrf.mxu0
  %v693 = vadd.f32 0.0, %v692
  %v694 = vpop.f32.mrf.mxu0
  %695 = vdwg.mxu0
  %v712 = vunpack.c.l.b16 %v455
  %v713 = vunpack.c.l.b16 %v456
  %v714 = vunpack.c.l.b16 %v457
  %v715 = vunpack.c.l.b16 %v458
  %v716 = vunpack.c.l.b16 %v459
  %v717 = vunpack.c.l.b16 %v460
  %v718 = vunpack.c.l.b16 %v461
  %v719 = vunpack.c.l.b16 %v462
  %v720 = vunpack.c.l.b16 %v463
  %v721 = vunpack.c.l.b16 %v464
  %v722 = vunpack.c.l.b16 %v465
  %v723 = vunpack.c.l.b16 %v466
  %v724 = vunpack.c.l.b16 %v467
  %v725 = vunpack.c.l.b16 %v468
  %v726 = vunpack.c.l.b16 %v469
  %v727 = vunpack.c.l.b16 %v470
  %v728 = vpack.c.b16 %v713, %v712
  %v729 = vpack.c.b16 %v715, %v714
  %v730 = vpack.c.b16 %v717, %v716
  %v731 = vpack.c.b16 %v719, %v718
  %v732 = vpack.c.b16 %v721, %v720
  %v733 = vpack.c.b16 %v723, %v722
  %v734 = vpack.c.b16 %v725, %v724
  %v735 = vpack.c.b16 %v727, %v726
  %744 = vmatprep.subr.bf16.mxu0 0
  %745 = vmatpush1.bf16.msra.mxu0 %v735
  %746 = vmatprep.subr.bf16.mxu0 0
  %747 = vmatpush1.bf16.msra.mxu0 %v734
  %748 = vmatprep.subr.bf16.mxu0 0
  %749 = vmatpush1.bf16.msra.mxu0 %v733
  %750 = vmatprep.subr.bf16.mxu0 0
  %751 = vmatpush1.bf16.msra.mxu0 %v732
  %752 = vmatprep.subr.bf16.mxu0 0
  %753 = vmatpush1.bf16.msra.mxu0 %v731
  %754 = vmatprep.subr.bf16.mxu0 0
  %755 = vmatpush1.bf16.msra.mxu0 %v730
  %756 = vmatprep.subr.bf16.mxu0 0
  %757 = vmatpush1.bf16.msra.mxu0 %v729
  %758 = vmatprep.subr.bf16.mxu0 0
  %759 = vmatpush1.bf16.msra.mxu0 %v728
  %760 = vmatprep.subr.bf16.mxu0 0
  %761 = vmatpush2.bf16.msra.mxu0 0
  %762 = vmatprep.subr.bf16.mxu0 0
  %763 = vmatpush2.bf16.msra.mxu0 0
  %764 = vmatprep.subr.bf16.mxu0 0
  %765 = vmatpush2.bf16.msra.mxu0 0
  %766 = vmatprep.subr.bf16.mxu0 0
  %767 = vmatpush2.bf16.msra.mxu0 0
  %768 = vmatprep.subr.bf16.mxu0 0
  %769 = vmatpush2.bf16.msra.mxu0 0
  %770 = vmatprep.subr.bf16.mxu0 0
  %771 = vmatpush2.bf16.msra.mxu0 0
  %772 = vmatprep.subr.bf16.mxu0 0
  %773 = vmatpush2.bf16.msra.mxu0 0
  %774 = vmatprep.subr.bf16.mxu0 0
  %775 = vmatpush2.bf16.msra.mxu0 0
  %776 = vmatprep.mubr.bf16.mxu0 0
  %777 = vmatmul.mubr.bf16.gmra.mxu0 %v447
  %v778 = vpop.f32.mrf.mxu0
  %v779 = vadd.f32 %v634, %v778
  %v780 = vpop.f32.mrf.mxu0
  %v781 = vpop.f32.mrf.mxu0
  %v782 = vadd.f32 %v637, %v781
  %v783 = vpop.f32.mrf.mxu0
  %784 = vmatprep.mubr.bf16.mxu0 0
  %785 = vmatmul.mubr.bf16.gmra.mxu0 %v448
  %v786 = vpop.f32.mrf.mxu0
  %v787 = vadd.f32 %v642, %v786
  %v788 = vpop.f32.mrf.mxu0
  %v789 = vpop.f32.mrf.mxu0
  %v790 = vadd.f32 %v645, %v789
  %v791 = vpop.f32.mrf.mxu0
  %792 = vmatprep.mubr.bf16.mxu0 0
  %793 = vmatmul.mubr.bf16.gmra.mxu0 %v449
  %v794 = vpop.f32.mrf.mxu0
  %v795 = vadd.f32 %v650, %v794
  %v796 = vpop.f32.mrf.mxu0
  %v797 = vpop.f32.mrf.mxu0
  %v798 = vadd.f32 %v653, %v797
  %v799 = vpop.f32.mrf.mxu0
  %800 = vmatprep.mubr.bf16.mxu0 0
  %801 = vmatmul.mubr.bf16.gmra.mxu0 %v450
  %v802 = vpop.f32.mrf.mxu0
  %v803 = vadd.f32 %v658, %v802
  %v804 = vpop.f32.mrf.mxu0
  %v805 = vpop.f32.mrf.mxu0
  %v806 = vadd.f32 %v661, %v805
  %v807 = vpop.f32.mrf.mxu0
  %808 = vmatprep.mubr.bf16.mxu0 0
  %809 = vmatmul.mubr.bf16.gmra.mxu0 %v451
  %v810 = vpop.f32.mrf.mxu0
  %v811 = vadd.f32 %v666, %v810
  %v812 = vpop.f32.mrf.mxu0
  %v813 = vpop.f32.mrf.mxu0
  %v814 = vadd.f32 %v669, %v813
  %v815 = vpop.f32.mrf.mxu0
  %816 = vmatprep.mubr.bf16.mxu0 0
  %817 = vmatmul.mubr.bf16.gmra.mxu0 %v452
  %v818 = vpop.f32.mrf.mxu0
  %v819 = vadd.f32 %v674, %v818
  %v820 = vpop.f32.mrf.mxu0
  %v821 = vpop.f32.mrf.mxu0
  %v822 = vadd.f32 %v677, %v821
  %v823 = vpop.f32.mrf.mxu0
  %824 = vmatprep.mubr.bf16.mxu0 0
  %825 = vmatmul.mubr.bf16.gmra.mxu0 %v453
  %v826 = vpop.f32.mrf.mxu0
  %v827 = vadd.f32 %v682, %v826
  %v828 = vpop.f32.mrf.mxu0
  %v829 = vpop.f32.mrf.mxu0
  %v830 = vadd.f32 %v685, %v829
  %v831 = vpop.f32.mrf.mxu0
  %832 = vmatprep.mubr.bf16.mxu0 0
  %833 = vmatmul.mubr.bf16.gmra.mxu0 %v454
  %v834 = vpop.f32.mrf.mxu0
  %v835 = vadd.f32 %v690, %v834
  %v836 = vpop.f32.mrf.mxu0
  %v837 = vpop.f32.mrf.mxu0
  %v838 = vadd.f32 %v693, %v837
  %v839 = vpop.f32.mrf.mxu0
  %840 = vdwg.mxu0
  %v841 = vpack.c.bf16 %v782, %v779
  %v842 = vpack.c.bf16 %v790, %v787
  %v843 = vpack.c.bf16 %v798, %v795
  %v844 = vpack.c.bf16 %v806, %v803
  %v845 = vpack.c.bf16 %v814, %v811
  %v846 = vpack.c.bf16 %v822, %v819
  %v847 = vpack.c.bf16 %v830, %v827
  %v848 = vpack.c.bf16 %v838, %v835
  %v849 = vld [vmem:[%s7] sm:$0x1]
  %v851 = vlaneseq
  %v852 = vshrl.u32 %v851, 7
  %v853 = vsub.s32 0, %v852
  %v854 = vrot.slane %v849, %v853
  %856 = vmatprep.subr.bf16.mxu0 0
  %857 = vmatpush1.bf16.msra.mxu0 %v848
  %858 = vmatprep.subr.bf16.mxu0 0
  %859 = vmatpush1.bf16.msra.mxu0 %v847
  %860 = vmatprep.subr.bf16.mxu0 0
  %861 = vmatpush1.bf16.msra.mxu0 %v846
  %862 = vmatprep.subr.bf16.mxu0 0
  %863 = vmatpush1.bf16.msra.mxu0 %v845
  %864 = vmatprep.subr.bf16.mxu0 0
  %865 = vmatpush1.bf16.msra.mxu0 %v844
  %866 = vmatprep.subr.bf16.mxu0 0
  %867 = vmatpush1.bf16.msra.mxu0 %v843
  %868 = vmatprep.subr.bf16.mxu0 0
  %869 = vmatpush1.bf16.msra.mxu0 %v842
  %870 = vmatprep.subr.bf16.mxu0 0
  %871 = vmatpush1.bf16.msra.mxu0 %v841
  %872 = vmatprep.subr.bf16.mxu0 0
  %873 = vmatpush2.bf16.msra.mxu0 0
  %874 = vmatprep.subr.bf16.mxu0 0
  %875 = vmatpush2.bf16.msra.mxu0 0
  %876 = vmatprep.subr.bf16.mxu0 0
  %877 = vmatpush2.bf16.msra.mxu0 0
  %878 = vmatprep.subr.bf16.mxu0 0
  %879 = vmatpush2.bf16.msra.mxu0 0
  %880 = vmatprep.subr.bf16.mxu0 0
  %881 = vmatpush2.bf16.msra.mxu0 0
  %882 = vmatprep.subr.bf16.mxu0 0
  %883 = vmatpush2.bf16.msra.mxu0 0
  %884 = vmatprep.subr.bf16.mxu0 0
  %885 = vmatpush2.bf16.msra.mxu0 0
  %886 = vmatprep.subr.bf16.mxu0 0
  %887 = vmatpush2.bf16.msra.mxu0 0
  %888 = vmatprep.mubr.bf16.mxu0 0
  %889 = vmatmul.mubr.bf16.gmra.mxu0 %v318
  %v890 = vpop.f32.mrf.mxu0
  %v891 = vadd.f32 %v854, %v890
  %v892 = vpop.f32.mrf.mxu0
  %v893 = vpop.f32.mrf.mxu0
  %v894 = vadd.f32 %v854, %v893
  %v895 = vpop.f32.mrf.mxu0
  %896 = vmatprep.mubr.bf16.mxu0 0
  %897 = vmatmul.mubr.bf16.gmra.mxu0 %v319
  %v898 = vpop.f32.mrf.mxu0
  %v899 = vadd.f32 %v854, %v898
  %v900 = vpop.f32.mrf.mxu0
  %v901 = vpop.f32.mrf.mxu0
  %v902 = vadd.f32 %v854, %v901
  %v903 = vpop.f32.mrf.mxu0
  %904 = vmatprep.mubr.bf16.mxu0 0
  %905 = vmatmul.mubr.bf16.gmra.mxu0 %v320
  %v906 = vpop.f32.mrf.mxu0
  %v907 = vadd.f32 %v854, %v906
  %v908 = vpop.f32.mrf.mxu0
  %v909 = vpop.f32.mrf.mxu0
  %v910 = vadd.f32 %v854, %v909
  %v911 = vpop.f32.mrf.mxu0
  %912 = vmatprep.mubr.bf16.mxu0 0
  %913 = vmatmul.mubr.bf16.gmra.mxu0 %v321
  %v914 = vpop.f32.mrf.mxu0
  %v915 = vadd.f32 %v854, %v914
  %v916 = vpop.f32.mrf.mxu0
  %v917 = vpop.f32.mrf.mxu0
  %v918 = vadd.f32 %v854, %v917
  %v919 = vpop.f32.mrf.mxu0
  %920 = vmatprep.mubr.bf16.mxu0 0
  %921 = vmatmul.mubr.bf16.gmra.mxu0 %v322
  %v922 = vpop.f32.mrf.mxu0
  %v923 = vadd.f32 %v854, %v922
  %v924 = vpop.f32.mrf.mxu0
  %v925 = vpop.f32.mrf.mxu0
  %v926 = vadd.f32 %v854, %v925
  %v927 = vpop.f32.mrf.mxu0
  %928 = vmatprep.mubr.bf16.mxu0 0
  %929 = vmatmul.mubr.bf16.gmra.mxu0 %v323
  %v930 = vpop.f32.mrf.mxu0
  %v931 = vadd.f32 %v854, %v930
  %v932 = vpop.f32.mrf.mxu0
  %v933 = vpop.f32.mrf.mxu0
  %v934 = vadd.f32 %v854, %v933
  %v935 = vpop.f32.mrf.mxu0
  %936 = vmatprep.mubr.bf16.mxu0 0
  %937 = vmatmul.mubr.bf16.gmra.mxu0 %v324
  %v938 = vpop.f32.mrf.mxu0
  %v939 = vadd.f32 %v854, %v938
  %v940 = vpop.f32.mrf.mxu0
  %v941 = vpop.f32.mrf.mxu0
  %v942 = vadd.f32 %v854, %v941
  %v943 = vpop.f32.mrf.mxu0
  %944 = vmatprep.mubr.bf16.mxu0 0
  %945 = vmatmul.mubr.bf16.gmra.mxu0 %v325
  %v946 = vpop.f32.mrf.mxu0
  %v947 = vadd.f32 %v854, %v946
  %v948 = vpop.f32.mrf.mxu0
  %v949 = vpop.f32.mrf.mxu0
  %v950 = vadd.f32 %v854, %v949
  %v951 = vpop.f32.mrf.mxu0
  %952 = vdwg.mxu0
  %953 = vst [vmem:[%s8] sm:$0xff] %v891
  %954 = vst [vmem:[%s8 + $0x8] sm:$0xff] %v894
  %955 = vst [vmem:[%s8 + $0x10] sm:$0xff] %v899
  %956 = vst [vmem:[%s8 + $0x18] sm:$0xff] %v902
  %957 = vst [vmem:[%s8 + $0x20] sm:$0xff] %v907
  %958 = vst [vmem:[%s8 + $0x28] sm:$0xff] %v910
  %959 = vst [vmem:[%s8 + $0x30] sm:$0xff] %v915
  %960 = vst [vmem:[%s8 + $0x38] sm:$0xff] %v918
  %961 = vst [vmem:[%s8 + $0x40] sm:$0xff] %v923
  %962 = vst [vmem:[%s8 + $0x48] sm:$0xff] %v926
  %963 = vst [vmem:[%s8 + $0x50] sm:$0xff] %v931
  %964 = vst [vmem:[%s8 + $0x58] sm:$0xff] %v934
  %965 = vst [vmem:[%s8 + $0x60] sm:$0xff] %v939
  %966 = vst [vmem:[%s8 + $0x68] sm:$0xff] %v942
  %967 = vst [vmem:[%s8 + $0x70] sm:$0xff] %v947
  %968 = vst [vmem:[%s8 + $0x78] sm:$0xff] %v950
  // Predicated region
  $region34: #{_forward_fused.1} parent=0 // pred_check
    _
  $region35: #{_forward_fused.1} parent=0 // pred_check_branch
    %970 = sbr.rel (0) target = $region37
  $region36: #{_forward_fused.1} parent=0 // pred_region
    _
  $region37: #{_forward_fused.1} parent=0 // pred_fallthru
    _
  // Predicated region
  $region38: #{_forward_fused.1} parent=0 // pred_check
    _
  $region39: #{_forward_fused.1} parent=0 // pred_check_branch
    %972 = sbr.rel (0) target = $region41
  $region40: #{_forward_fused.1} parent=0 // pred_region
    _
  $region41: #{_forward_fused.1} parent=0 // pred_fallthru
    _

</llo_original>
